<compile_context>
chip_gen: v6e
topology: v6e:2x2x1
jax: 0.10.0
libtpu: 0.0.40
codegen_flags: <defaults>
</compile_context>

<pallas_src>
import functools

import jax
import jax.numpy as jnp
from jax.experimental import pallas as pl
from jax.experimental.pallas import tpu as pltpu


_LANES = 512                 # lane-dense tile width (multiple of 128)
_NCAND = 8                   # candidates per round (3 bits refined per round)
_BITS_PER_ROUND = 3
_ROUNDS = 11                 # 11 * 3 = 33 >= 31 magnitude bits -> exact threshold
_MSB_SHIFT = 30              # round 0 refines bit 30 (bit 31 is the sign, 0 for |x|)
_ONESHOT_MAX_ELEMS = 1 << 20  # <= 4 MiB f32: whole problem lives in VMEM
_P1_TILE_ROWS = 1024         # 2 MiB input tiles for the counting passes
_P2_TILE_ROWS = 2048         # 4 MiB tiles for the bandwidth-bound apply pass
_VMEM_LIMIT = 40 * 1024 * 1024  # < 64 MiB physical on v7x, fine on v5e/v6e


def _abs_bits(x):
    """Bit pattern of |x| as int32 (order-isomorphic to |x| for finite floats)."""
    return pltpu.bitcast(jnp.abs(x).astype(jnp.float32), jnp.int32)


# ---------------------------------------------------------------------------
# One-shot path: whole array resident in VMEM, single launch, 1 read + 1 write.
# ---------------------------------------------------------------------------
def _oneshot_kernel(x_ref, o_ref, *, k):
    x = x_ref[...]
    bits = _abs_bits(x)

    def round_body(r, prefix):
        shift = jnp.int32(_MSB_SHIFT) - jnp.int32(_BITS_PER_ROUND) * r
        best = prefix
        for j in range(_NCAND):
            cand = prefix + jnp.left_shift(jnp.int32(j), shift)
            cnt = jnp.sum((bits >= cand).astype(jnp.int32))
            # cand < 0 means the shift overflowed into the sign bit (round 0,
            # large j); such candidates are above any |x| pattern -> invalid.
            ok = (cnt >= jnp.int32(k)) & (cand >= 0)
            best = jnp.where(ok, cand, best)
        return best

    thr = jax.lax.fori_loop(0, _ROUNDS, round_body, jnp.int32(0))
    o_ref[...] = jnp.where(bits >= thr, x, jnp.zeros_like(x))


def _topk_oneshot(x2d, k):
    rows, lanes = x2d.shape
    return pl.pallas_call(
        functools.partial(_oneshot_kernel, k=k),
        out_shape=jax.ShapeDtypeStruct((rows, lanes), x2d.dtype),
        grid=(1,),
        in_specs=[pl.BlockSpec((rows, lanes), lambda i: (0, 0))],
        out_specs=pl.BlockSpec((rows, lanes), lambda i: (0, 0)),
        compiler_params=pltpu.CompilerParams(
            dimension_semantics=("arbitrary",),
            vmem_limit_bytes=_VMEM_LIMIT),
    )(x2d)


# ---------------------------------------------------------------------------
# Tiled path (HBM-resident arrays): phase 1 radix select + phase 2 apply.
# ---------------------------------------------------------------------------
def _radix_select_kernel(x_ref, thr_ref, prefix_sm, cnt_ref, *,
                         k, n_tiles, tile_rows, valid_rows):
    """Phase 1: exact bit pattern of the k-th largest |x| via 3-bit radix select."""
    r = pl.program_id(0)  # round (outer, serial)
    t = pl.program_id(1)  # tile  (inner, serial reduction over tiles)
    shift = jnp.int32(_MSB_SHIFT) - jnp.int32(_BITS_PER_ROUND) * r

    @pl.when((r == 0) & (t == 0))
    def _():
        prefix_sm[0] = jnp.int32(0)

    # Fresh per-candidate, per-lane partial counts at the start of each round.
    @pl.when(t == 0)
    def _():
        cnt_ref[...] = jnp.zeros_like(cnt_ref)

    prefix = prefix_sm[0]
    bits = _abs_bits(x_ref[...])

    # Ragged last tile: rows past `valid_rows` hold stale VMEM garbage (the
    # input DMA is clipped); force their bit patterns below every candidate.
    if valid_rows % tile_rows != 0:
        row = jax.lax.broadcasted_iota(jnp.int32, bits.shape, 0) + t * tile_rows
        bits = jnp.where(row < valid_rows, bits, jnp.int32(-1))

    # All candidates share one load of the tile; only row (sublane) sums here,
    # the cross-lane reduce is deferred to the end of the round.
    for j in range(_NCAND):
        cand = prefix + jnp.left_shift(jnp.int32(j), shift)
        cnt_ref[j] += jnp.sum((bits >= cand).astype(jnp.int32), axis=0,
                              keepdims=True)

    # Last tile of the round: keep the largest candidate still covering >= k
    # elements (candidate 0 == current prefix always qualifies).
    @pl.when(t == n_tiles - 1)
    def _():
        best = prefix
        for j in range(_NCAND):
            cand = prefix + jnp.left_shift(jnp.int32(j), shift)
            cnt_j = jnp.sum(cnt_ref[j])
            ok = (cnt_j >= jnp.int32(k)) & (cand >= 0)
            best = jnp.where(ok, cand, best)
        prefix_sm[0] = best
        thr_ref[...] = jnp.broadcast_to(best, thr_ref.shape)


def _apply_threshold_kernel(thr_sm, x_ref, o_ref):
    """Phase 2: keep x where bit-pattern(|x|) >= threshold, else zero."""
    x = x_ref[...]
    bits = _abs_bits(x)
    o_ref[...] = jnp.where(bits >= thr_sm[0], x, jnp.zeros_like(x))


def _topk_tiled(x2d, k):
    rows, lanes = x2d.shape
    n = rows * lanes

    # ---- phase 1: exact threshold (11 counting passes, pipelined tiles) ----
    tile1 = min(rows, _P1_TILE_ROWS)
    n_tiles = -(-rows // tile1)
    thr = pl.pallas_call(
        functools.partial(_radix_select_kernel, k=k, n_tiles=n_tiles,
                          tile_rows=tile1, valid_rows=rows),
        out_shape=jax.ShapeDtypeStruct((1, 128), jnp.int32),
        grid=(_ROUNDS, n_tiles),
        in_specs=[pl.BlockSpec((tile1, lanes), lambda r, t: (t, 0))],
        out_specs=pl.BlockSpec((1, 128), lambda r, t: (0, 0)),
        scratch_shapes=[
            pltpu.SMEM((1,), jnp.int32),                 # current prefix
            pltpu.VMEM((_NCAND, 1, lanes), jnp.int32),   # per-lane partial counts
        ],
        compiler_params=pltpu.CompilerParams(
            dimension_semantics=("arbitrary", "arbitrary"),
            vmem_limit_bytes=_VMEM_LIMIT),
        cost_estimate=pl.CostEstimate(
            flops=3 * _NCAND * _ROUNDS * n,
            transcendentals=0,
            bytes_accessed=4 * _ROUNDS * n),
    )(x2d)

    # ---- phase 2: apply threshold (1 read + 1 write, megacore-parallel) ----
    tile2 = min(rows, _P2_TILE_ROWS)
    out2d = pl.pallas_call(
        _apply_threshold_kernel,
        out_shape=jax.ShapeDtypeStruct((rows, lanes), x2d.dtype),
        grid_spec=pltpu.PrefetchScalarGridSpec(
            num_scalar_prefetch=1,
            grid=(-(-rows // tile2),),
            in_specs=[pl.BlockSpec((tile2, lanes), lambda i, thr_ref: (i, 0))],
            out_specs=pl.BlockSpec((tile2, lanes), lambda i, thr_ref: (i, 0)),
        ),
        compiler_params=pltpu.CompilerParams(
            dimension_semantics=("parallel",),
            vmem_limit_bytes=_VMEM_LIMIT),
        cost_estimate=pl.CostEstimate(
            flops=4 * n, transcendentals=0, bytes_accessed=8 * n),
    )(thr.reshape(-1), x2d)
    return out2d


# ---------------------------------------------------------------------------
# Wrapper (module forward).
# ---------------------------------------------------------------------------
def topk_layer(x, ratio, *, force_tiled=False):
    """Pallas TPU implementation of TopkLayer.forward (global magnitude top-k)."""
    if not isinstance(ratio, (int, float)):
        raise ValueError("ratio must be a static Python number")
    shape = x.shape
    n = int(x.size)
    if n == 0:
        return x
    k = int(ratio * n)           # matches int(ratio * input.shape[0]) in torch
    k = max(0, min(k, n))
    if k == 0:
        return jnp.zeros_like(x)
    if k == n:
        return x

    flat = x.reshape(-1)
    pad = (-n) % _LANES
    if pad:
        # Zero padding can never displace a real top-k element (|0| only passes
        # the always-qualifying zero candidate); the tail is dropped below.
        flat = jnp.concatenate([flat, jnp.zeros((pad,), flat.dtype)])
    rows = (n + pad) // _LANES
    x2d = flat.reshape(rows, _LANES)

    if (n <= _ONESHOT_MAX_ELEMS) and not force_tiled:
        out2d = _topk_oneshot(x2d, k)
    else:
        out2d = _topk_tiled(x2d, k)

    if pad:
        return out2d.reshape(-1)[:n].reshape(shape)
    return out2d.reshape(shape)


# ---------------------------------------------------------------------------
# Reference (tie-keeping threshold semantics, robust to equal magnitudes).
# ---------------------------------------------------------------------------
def _reference_keep_ties(x, k):
    flat_abs = jnp.abs(x.reshape(-1))
    kth = jax.lax.top_k(flat_abs, k)[0][-1]
    return jnp.where(jnp.abs(x) >= kth, x, jnp.zeros_like(x))


if __name__ == "__main__":
    key = jax.random.PRNGKey(0)
    ratio = 0.25  # TopkLayer(compress_ratio=0.25, shape=x.shape)

    # 1) Demo NCHW activation shape -> one-shot VMEM path.
    x = jax.random.normal(key, (2, 4, 16, 16), dtype=jnp.float32)
    out = jax.block_until_ready(topk_layer(x, ratio))
    k = int(ratio * x.size)
    ref = _reference_keep_ties(x, k)
    assert out.shape == x.shape and out.dtype == x.dtype
    assert bool(jnp.array_equal(out, ref)), "mismatch vs reference (demo)"
    assert int(jnp.sum(out != 0)) >= k

    # 2) Ragged size (not a multiple of 512) -> exercises the pad/slice path.
    x2 = jax.random.normal(jax.random.fold_in(key, 1), (2, 3, 7, 11),
                           dtype=jnp.float32)
    out2 = jax.block_until_ready(topk_layer(x2, ratio))
    ref2 = _reference_keep_ties(x2, int(ratio * x2.size))
    assert bool(jnp.array_equal(out2, ref2)), "mismatch vs reference (ragged)"

    # 3) Force the tiled two-phase path (multi-tile phase 1 + ragged last tile).
    x3 = jax.random.normal(jax.random.fold_in(key, 2), (10, 16, 64, 64),
                           dtype=jnp.float32)
    out3 = jax.block_until_ready(topk_layer(x3, ratio, force_tiled=True))
    k3 = int(ratio * x3.size)
    ref3 = _reference_keep_ties(x3, k3)
    assert bool(jnp.array_equal(out3, ref3)), "mismatch vs reference (tiled)"
    assert int(jnp.sum(out3 != 0)) >= k3

    print("KERNEL_OK")
</pallas_src>

<mosaic_0001>
module attributes {stable_mosaic.version = 11 : i64} {
  func.func @_oneshot_kernel(%arg0: i32, %arg1: memref<4x512xf32, #tpu.memory_space<vmem>>, %arg2: memref<4x512xf32, #tpu.memory_space<vmem>>) attributes {dimension_semantics = [#tpu.dimension_semantics<arbitrary>], iteration_bounds = array<i64: 1>, scalar_prefetch = 0 : i64, scratch_operands = 0 : i64, tpu.core_type = #tpu.core_type<tc>, window_params = [{pipeline_mode = #tpu.pipeline_mode<synchronous>, transform_indices = @transform_0, window_bounds = array<i64: 4, 512>}, {pipeline_mode = #tpu.pipeline_mode<synchronous>, transform_indices = @transform_1, window_bounds = array<i64: 4, 512>}]} {
    %c0 = arith.constant 0 : index
    %c0_0 = arith.constant 0 : index
    %0 = vector.load %arg1[%c0, %c0_0] : memref<4x512xf32, #tpu.memory_space<vmem>>, vector<4x512xf32>
    %1 = math.absf %0 : vector<4x512xf32>
    %2 = tpu.bitcast %1 : vector<4x512xf32> -> vector<4x512xi32>
    %c0_i32 = arith.constant 0 : i32
    %c0_i32_1 = arith.constant 0 : i32
    %c11_i32 = arith.constant 11 : i32
    %3 = arith.addi %c0_i32_1, %c11_i32 : i32
    %c1_i32 = arith.constant 1 : i32
    %4 = scf.for %arg3 = %c0_i32_1 to %3 step %c1_i32 iter_args(%arg4 = %c0_i32) -> (i32)  : i32 {
      %c3_i32 = arith.constant 3 : i32
      %10 = arith.muli %c3_i32, %arg3 : i32
      %c30_i32 = arith.constant 30 : i32
      %11 = arith.subi %c30_i32, %10 : i32
      %c0_i32_5 = arith.constant 0 : i32
      %12 = arith.shli %c0_i32_5, %11 : i32
      %13 = arith.addi %arg4, %12 : i32
      %14 = vector.broadcast %13 : i32 to vector<4x512xi32>
      %15 = arith.cmpi sge, %2, %14 : vector<4x512xi32>
      %16 = arith.extui %15 : vector<4x512xi1> to vector<4x512xi32>
      %17 = vector.shape_cast %16 : vector<4x512xi32> to vector<1x4x512xi32>
      %cst_6 = arith.constant dense<0> : vector<1xi32>
      %18 = vector.multi_reduction <add>, %17, %cst_6 [1, 2] : vector<1x4x512xi32> to vector<1xi32>
      %19 = vector.shape_cast %18 : vector<1xi32> to vector<1x1x1xi32>
      %20 = vector.extract %19[0, 0, 0] : i32 from vector<1x1x1xi32>
      %c512_i32 = arith.constant 512 : i32
      %21 = arith.cmpi sge, %20, %c512_i32 : i32
      %c0_i32_7 = arith.constant 0 : i32
      %22 = arith.cmpi sge, %13, %c0_i32_7 : i32
      %23 = arith.andi %21, %22 : i1
      %24 = arith.select %23, %13, %arg4 : i32
      %c1_i32_8 = arith.constant 1 : i32
      %25 = arith.shli %c1_i32_8, %11 : i32
      %26 = arith.addi %arg4, %25 : i32
      %27 = vector.broadcast %26 : i32 to vector<4x512xi32>
      %28 = arith.cmpi sge, %2, %27 : vector<4x512xi32>
      %29 = arith.extui %28 : vector<4x512xi1> to vector<4x512xi32>
      %30 = vector.shape_cast %29 : vector<4x512xi32> to vector<1x4x512xi32>
      %cst_9 = arith.constant dense<0> : vector<1xi32>
      %31 = vector.multi_reduction <add>, %30, %cst_9 [1, 2] : vector<1x4x512xi32> to vector<1xi32>
      %32 = vector.shape_cast %31 : vector<1xi32> to vector<1x1x1xi32>
      %33 = vector.extract %32[0, 0, 0] : i32 from vector<1x1x1xi32>
      %c512_i32_10 = arith.constant 512 : i32
      %34 = arith.cmpi sge, %33, %c512_i32_10 : i32
      %c0_i32_11 = arith.constant 0 : i32
      %35 = arith.cmpi sge, %26, %c0_i32_11 : i32
      %36 = arith.andi %34, %35 : i1
      %37 = arith.select %36, %26, %24 : i32
      %c2_i32 = arith.constant 2 : i32
      %38 = arith.shli %c2_i32, %11 : i32
      %39 = arith.addi %arg4, %38 : i32
      %40 = vector.broadcast %39 : i32 to vector<4x512xi32>
      %41 = arith.cmpi sge, %2, %40 : vector<4x512xi32>
      %42 = arith.extui %41 : vector<4x512xi1> to vector<4x512xi32>
      %43 = vector.shape_cast %42 : vector<4x512xi32> to vector<1x4x512xi32>
      %cst_12 = arith.constant dense<0> : vector<1xi32>
      %44 = vector.multi_reduction <add>, %43, %cst_12 [1, 2] : vector<1x4x512xi32> to vector<1xi32>
      %45 = vector.shape_cast %44 : vector<1xi32> to vector<1x1x1xi32>
      %46 = vector.extract %45[0, 0, 0] : i32 from vector<1x1x1xi32>
      %c512_i32_13 = arith.constant 512 : i32
      %47 = arith.cmpi sge, %46, %c512_i32_13 : i32
      %c0_i32_14 = arith.constant 0 : i32
      %48 = arith.cmpi sge, %39, %c0_i32_14 : i32
      %49 = arith.andi %47, %48 : i1
      %50 = arith.select %49, %39, %37 : i32
      %c3_i32_15 = arith.constant 3 : i32
      %51 = arith.shli %c3_i32_15, %11 : i32
      %52 = arith.addi %arg4, %51 : i32
      %53 = vector.broadcast %52 : i32 to vector<4x512xi32>
      %54 = arith.cmpi sge, %2, %53 : vector<4x512xi32>
      %55 = arith.extui %54 : vector<4x512xi1> to vector<4x512xi32>
      %56 = vector.shape_cast %55 : vector<4x512xi32> to vector<1x4x512xi32>
      %cst_16 = arith.constant dense<0> : vector<1xi32>
      %57 = vector.multi_reduction <add>, %56, %cst_16 [1, 2] : vector<1x4x512xi32> to vector<1xi32>
      %58 = vector.shape_cast %57 : vector<1xi32> to vector<1x1x1xi32>
      %59 = vector.extract %58[0, 0, 0] : i32 from vector<1x1x1xi32>
      %c512_i32_17 = arith.constant 512 : i32
      %60 = arith.cmpi sge, %59, %c512_i32_17 : i32
      %c0_i32_18 = arith.constant 0 : i32
      %61 = arith.cmpi sge, %52, %c0_i32_18 : i32
      %62 = arith.andi %60, %61 : i1
      %63 = arith.select %62, %52, %50 : i32
      %c4_i32 = arith.constant 4 : i32
      %64 = arith.shli %c4_i32, %11 : i32
      %65 = arith.addi %arg4, %64 : i32
      %66 = vector.broadcast %65 : i32 to vector<4x512xi32>
      %67 = arith.cmpi sge, %2, %66 : vector<4x512xi32>
      %68 = arith.extui %67 : vector<4x512xi1> to vector<4x512xi32>
      %69 = vector.shape_cast %68 : vector<4x512xi32> to vector<1x4x512xi32>
      %cst_19 = arith.constant dense<0> : vector<1xi32>
      %70 = vector.multi_reduction <add>, %69, %cst_19 [1, 2] : vector<1x4x512xi32> to vector<1xi32>
      %71 = vector.shape_cast %70 : vector<1xi32> to vector<1x1x1xi32>
      %72 = vector.extract %71[0, 0, 0] : i32 from vector<1x1x1xi32>
      %c512_i32_20 = arith.constant 512 : i32
      %73 = arith.cmpi sge, %72, %c512_i32_20 : i32
      %c0_i32_21 = arith.constant 0 : i32
      %74 = arith.cmpi sge, %65, %c0_i32_21 : i32
      %75 = arith.andi %73, %74 : i1
      %76 = arith.select %75, %65, %63 : i32
      %c5_i32 = arith.constant 5 : i32
      %77 = arith.shli %c5_i32, %11 : i32
      %78 = arith.addi %arg4, %77 : i32
      %79 = vector.broadcast %78 : i32 to vector<4x512xi32>
      %80 = arith.cmpi sge, %2, %79 : vector<4x512xi32>
      %81 = arith.extui %80 : vector<4x512xi1> to vector<4x512xi32>
      %82 = vector.shape_cast %81 : vector<4x512xi32> to vector<1x4x512xi32>
      %cst_22 = arith.constant dense<0> : vector<1xi32>
      %83 = vector.multi_reduction <add>, %82, %cst_22 [1, 2] : vector<1x4x512xi32> to vector<1xi32>
      %84 = vector.shape_cast %83 : vector<1xi32> to vector<1x1x1xi32>
      %85 = vector.extract %84[0, 0, 0] : i32 from vector<1x1x1xi32>
      %c512_i32_23 = arith.constant 512 : i32
      %86 = arith.cmpi sge, %85, %c512_i32_23 : i32
      %c0_i32_24 = arith.constant 0 : i32
      %87 = arith.cmpi sge, %78, %c0_i32_24 : i32
      %88 = arith.andi %86, %87 : i1
      %89 = arith.select %88, %78, %76 : i32
      %c6_i32 = arith.constant 6 : i32
      %90 = arith.shli %c6_i32, %11 : i32
      %91 = arith.addi %arg4, %90 : i32
      %92 = vector.broadcast %91 : i32 to vector<4x512xi32>
      %93 = arith.cmpi sge, %2, %92 : vector<4x512xi32>
      %94 = arith.extui %93 : vector<4x512xi1> to vector<4x512xi32>
      %95 = vector.shape_cast %94 : vector<4x512xi32> to vector<1x4x512xi32>
      %cst_25 = arith.constant dense<0> : vector<1xi32>
      %96 = vector.multi_reduction <add>, %95, %cst_25 [1, 2] : vector<1x4x512xi32> to vector<1xi32>
      %97 = vector.shape_cast %96 : vector<1xi32> to vector<1x1x1xi32>
      %98 = vector.extract %97[0, 0, 0] : i32 from vector<1x1x1xi32>
      %c512_i32_26 = arith.constant 512 : i32
      %99 = arith.cmpi sge, %98, %c512_i32_26 : i32
      %c0_i32_27 = arith.constant 0 : i32
      %100 = arith.cmpi sge, %91, %c0_i32_27 : i32
      %101 = arith.andi %99, %100 : i1
      %102 = arith.select %101, %91, %89 : i32
      %c7_i32 = arith.constant 7 : i32
      %103 = arith.shli %c7_i32, %11 : i32
      %104 = arith.addi %arg4, %103 : i32
      %105 = vector.broadcast %104 : i32 to vector<4x512xi32>
      %106 = arith.cmpi sge, %2, %105 : vector<4x512xi32>
      %107 = arith.extui %106 : vector<4x512xi1> to vector<4x512xi32>
      %108 = vector.shape_cast %107 : vector<4x512xi32> to vector<1x4x512xi32>
      %cst_28 = arith.constant dense<0> : vector<1xi32>
      %109 = vector.multi_reduction <add>, %108, %cst_28 [1, 2] : vector<1x4x512xi32> to vector<1xi32>
      %110 = vector.shape_cast %109 : vector<1xi32> to vector<1x1x1xi32>
      %111 = vector.extract %110[0, 0, 0] : i32 from vector<1x1x1xi32>
      %c512_i32_29 = arith.constant 512 : i32
      %112 = arith.cmpi sge, %111, %c512_i32_29 : i32
      %c0_i32_30 = arith.constant 0 : i32
      %113 = arith.cmpi sge, %104, %c0_i32_30 : i32
      %114 = arith.andi %112, %113 : i1
      %115 = arith.select %114, %104, %102 : i32
      scf.yield %115 : i32
    }
    %c11_i32_2 = arith.constant 11 : i32
    %5 = vector.broadcast %4 : i32 to vector<4x512xi32>
    %6 = arith.cmpi sge, %2, %5 : vector<4x512xi32>
    %cst = arith.constant 0.000000e+00 : f32
    %7 = vector.broadcast %cst : f32 to vector<4x512xf32>
    %8 = arith.select %6, %0, %7 : vector<4x512xi1>, vector<4x512xf32>
    %c0_3 = arith.constant 0 : index
    %c0_4 = arith.constant 0 : index
    %9 = vector.load %arg2[%c0_3, %c0_4] : memref<4x512xf32, #tpu.memory_space<vmem>>, vector<4x512xf32>
    tpu.vector_store %arg2[%c0_3, %c0_4], %8 {strides = array<i32>} : memref<4x512xf32, #tpu.memory_space<vmem>>, vector<4x512xf32>,
    return
  }
  func.func @transform_0(%arg0: i32) -> (i32, i32) {
    %c0_i32 = arith.constant 0 : i32
    %c0_i32_0 = arith.constant 0 : i32
    %c0_i32_1 = arith.constant 0 : i32
    return %c0_i32, %c0_i32_0 : i32, i32
  }
  func.func @transform_1(%arg0: i32) -> (i32, i32) {
    %c0_i32 = arith.constant 0 : i32
    %c0_i32_0 = arith.constant 0 : i32
    %c0_i32_1 = arith.constant 0 : i32
    return %c0_i32, %c0_i32_0 : i32, i32
  }
}

</mosaic_0001>

<llo_original>
// kernel: tpu_custom_call.1
$region0: #{tpu_custom_call.1}
  #allocation0 [shape = 'u32[]', space=smem, size = 0x4, offset = 0x4, fixed_abs, tag = 'smem constant byte address 0x4 - core index']
  #allocation1 [shape = 'u32[144,128]{1,0:T(1,128)}', space=vmem, size = 0x12000, scoped, tag = 'internal scratch']
  %s0 = inlined_call_operand.hbm [shape: f32[4,512], index: 0, kind: input, shape index: {}]
  %s1 = inlined_call_operand.hbm [shape: f32[4,512], index: 1, kind: output, shape index: {}]
  %s2 = sld [smem:[#allocation0]]
  $region25: #{tpu_custom_call.1} parent=0
    _
  %s4 = ssub.s32 1, %s2
  %s5 = scalar_select 0, %s4, %s2
  $region1: #{tpu_custom_call.1} parent=0
    #allocation2 [shape = 'u8[8192]{0}', space=vmem, size = 0x2000, scoped, tag = 'input window, operand 0, single buffered']
    #allocation3 [shape = 's32[1]{0}', space=sflag, size = 0x4, scoped, tag = 'scoped memory for tpu_custom_call.1']
    #allocation4 [shape = 's32[1]{0}', space=sflag, size = 0x4, scoped, tag = 'scoped memory for tpu_custom_call.1']
    #allocation5 [shape = 'u8[8192]{0}', space=vmem, size = 0x2000, scoped, tag = 'output window, operand 0, single buffered']
    %6 = vsyncpa [#allocation3], 0
    %7 = vsyncpa [#allocation4], 0
    // Predicated region
    $region2: #{tpu_custom_call.1} parent=1 // pred_check
      _
    $region3: #{tpu_custom_call.1} parent=1 // pred_check_branch
      %9 = sbr.rel (0) target = $region5
    $region4: #{tpu_custom_call.1} parent=1 // pred_region
      %s11 = ssub.s32 256, 256
      %12 = vsyncadd [#allocation3], %s11
      %s14 = sshll.u32 [#allocation2], 4
      %s15 = int_to_ptr.vmem [resolvable:$true] %s14
      %17 = dma.hbm_to_vmem [thread:$0]  %s0, 256, %s15, [#allocation3]
    $region5: #{tpu_custom_call.1} parent=1 // pred_fallthru
      _
    // Predicated region
    $region6: #{tpu_custom_call.1} parent=1 // pred_check
      _
    $region7: #{tpu_custom_call.1} parent=1 // pred_check_branch
      %19 = sbr.rel (0) target = $region9
    $region8: #{tpu_custom_call.1} parent=1 // pred_region
      %20 = dma.done [#allocation3], 256
    $region9: #{tpu_custom_call.1} parent=1 // pred_fallthru
      _
    %v21 = vld [vmem:[#allocation2] sm:$0xff]
    %v22 = vld [vmem:[#allocation2 + $0x8] sm:$0xff]
    %v23 = vand.u32 2147483647, %v21
    %v24 = vand.u32 2147483647, %v22
    %v27 = vcombine.high %v23, %v23
    %v28 = vcombine.high %v24, %v24
    loop: start=0, step=1, limit=11
    $region10: #{tpu_custom_call.1} parent=1 // loop_pre_header
      _
    $region11: #{tpu_custom_call.1} parent=1 // loop_header
      %s30 = sphi 0, %s34
      %p31 = scmp.ge.s32.totalorder %s30, 11
      %s35 = sphi 0, %s374
    $region12: #{tpu_custom_call.1} parent=1 // loop_header_branch
      %33 = sbr.rel (%p31) target = $region16
    $region13: #{tpu_custom_call.1} parent=1 // loop_body
      %s36 = smul.u32 %s30, 3
      %s37 = ssub.s32 30, %s36
      %s38 = sshll.u32 0, %s37
      %s39 = sadd.s32 %s35, %s38
      %v40 = vstv %s39
      %vm41 = vcmp.ge.s32.totalorder %v23, %v40
      %vm42 = vcmp.ge.s32.totalorder %v27, %v40
      %vm43 = vcmp.ge.s32.totalorder %v24, %v40
      %vm44 = vcmp.ge.s32.totalorder %v28, %v40
      %v45 = vsel %vm41, 1, 0
      %v46 = vsel %vm42, 1, 0
      %v47 = vsel %vm43, 1, 0
      %v48 = vsel %vm44, 1, 0
      %vm49 = vcmask 1043456
      %v50 = vsel %vm49, %v45, 0
      %v51 = vsel %vm49, %v46, 0
      %v52 = vsel %vm49, %v47, 0
      %v53 = vsel %vm49, %v48, 0
      %v54 = vadd.s32 %v50, %v51
      %v55 = vadd.s32 %v52, %v53
      %v56 = vadd.s32 %v54, %v55
      %v57 = vand.u32 %v56, 65535
      %v58 = vshrl.u32 %v56, 16
      %v59 = vcvt.s32.f32 %v57
      %v60 = vcvt.s32.f32 %v58
      %61 = vadd.xlane.f32.xlu0 %v59
      %v62 = vpop.xlane.xlu0 %61
      %63 = vadd.xlane.f32.xlu0 %v60
      %v64 = vpop.xlane.xlu0 %63
      %v65 = vcvt.f32.s32 %v62
      %v66 = vcvt.f32.s32 %v64
      %v67 = vshll.u32 %v66, 16
      %v68 = vadd.s32 %v67, %v65
      %v69 = vrot.slane %v68, 4
      %v70 = vadd.s32 %v68, %v69
      %v71 = vrot.slane %v70, 2
      %v72 = vadd.s32 %v70, %v71
      %v73 = vrot.slane %v72, 1
      %v74 = vadd.s32 %v72, %v73
      %s75 = vtos %v74
      %p76 = scmp.ge.s32.totalorder %s75, 512
      %p77 = scmp.ge.s32.totalorder %s39, 0
      %p78 = pnand %p76, %p77
      %p79 = pneg %p78
      %s80 = scalar_select %p79, %s39, %s35
      %s81 = sshll.u32 1, %s37
      %s82 = sadd.s32 %s35, %s81
      %v83 = vstv %s82
      %vm84 = vcmp.ge.s32.totalorder %v23, %v83
      %vm85 = vcmp.ge.s32.totalorder %v27, %v83
      %vm86 = vcmp.ge.s32.totalorder %v24, %v83
      %vm87 = vcmp.ge.s32.totalorder %v28, %v83
      %v88 = vsel %vm84, 1, 0
      %v89 = vsel %vm85, 1, 0
      %v90 = vsel %vm86, 1, 0
      %v91 = vsel %vm87, 1, 0
      %v92 = vsel %vm49, %v88, 0
      %v93 = vsel %vm49, %v89, 0
      %v94 = vsel %vm49, %v90, 0
      %v95 = vsel %vm49, %v91, 0
      %v96 = vadd.s32 %v92, %v93
      %v97 = vadd.s32 %v94, %v95
      %v98 = vadd.s32 %v96, %v97
      %v99 = vand.u32 %v98, 65535
      %v100 = vshrl.u32 %v98, 16
      %v101 = vcvt.s32.f32 %v99
      %v102 = vcvt.s32.f32 %v100
      %103 = vadd.xlane.f32.xlu0 %v101
      %v104 = vpop.xlane.xlu0 %103
      %105 = vadd.xlane.f32.xlu0 %v102
      %v106 = vpop.xlane.xlu0 %105
      %v107 = vcvt.f32.s32 %v104
      %v108 = vcvt.f32.s32 %v106
      %v109 = vshll.u32 %v108, 16
      %v110 = vadd.s32 %v109, %v107
      %v111 = vrot.slane %v110, 4
      %v112 = vadd.s32 %v110, %v111
      %v113 = vrot.slane %v112, 2
      %v114 = vadd.s32 %v112, %v113
      %v115 = vrot.slane %v114, 1
      %v116 = vadd.s32 %v114, %v115
      %s117 = vtos %v116
      %p118 = scmp.ge.s32.totalorder %s117, 512
      %p119 = scmp.ge.s32.totalorder %s82, 0
      %p120 = pnand %p118, %p119
      %p121 = pneg %p120
      %s122 = scalar_select %p121, %s82, %s80
      %s123 = sshll.u32 2, %s37
      %s124 = sadd.s32 %s35, %s123
      %v125 = vstv %s124
      %vm126 = vcmp.ge.s32.totalorder %v23, %v125
      %vm127 = vcmp.ge.s32.totalorder %v27, %v125
      %vm128 = vcmp.ge.s32.totalorder %v24, %v125
      %vm129 = vcmp.ge.s32.totalorder %v28, %v125
      %v130 = vsel %vm126, 1, 0
      %v131 = vsel %vm127, 1, 0
      %v132 = vsel %vm128, 1, 0
      %v133 = vsel %vm129, 1, 0
      %v134 = vsel %vm49, %v130, 0
      %v135 = vsel %vm49, %v131, 0
      %v136 = vsel %vm49, %v132, 0
      %v137 = vsel %vm49, %v133, 0
      %v138 = vadd.s32 %v134, %v135
      %v139 = vadd.s32 %v136, %v137
      %v140 = vadd.s32 %v138, %v139
      %v141 = vand.u32 %v140, 65535
      %v142 = vshrl.u32 %v140, 16
      %v143 = vcvt.s32.f32 %v141
      %v144 = vcvt.s32.f32 %v142
      %145 = vadd.xlane.f32.xlu0 %v143
      %v146 = vpop.xlane.xlu0 %145
      %147 = vadd.xlane.f32.xlu0 %v144
      %v148 = vpop.xlane.xlu0 %147
      %v149 = vcvt.f32.s32 %v146
      %v150 = vcvt.f32.s32 %v148
      %v151 = vshll.u32 %v150, 16
      %v152 = vadd.s32 %v151, %v149
      %v153 = vrot.slane %v152, 4
      %v154 = vadd.s32 %v152, %v153
      %v155 = vrot.slane %v154, 2
      %v156 = vadd.s32 %v154, %v155
      %v157 = vrot.slane %v156, 1
      %v158 = vadd.s32 %v156, %v157
      %s159 = vtos %v158
      %p160 = scmp.ge.s32.totalorder %s159, 512
      %p161 = scmp.ge.s32.totalorder %s124, 0
      %p162 = pnand %p160, %p161
      %p163 = pneg %p162
      %s164 = scalar_select %p163, %s124, %s122
      %s165 = sshll.u32 3, %s37
      %s166 = sadd.s32 %s35, %s165
      %v167 = vstv %s166
      %vm168 = vcmp.ge.s32.totalorder %v23, %v167
      %vm169 = vcmp.ge.s32.totalorder %v27, %v167
      %vm170 = vcmp.ge.s32.totalorder %v24, %v167
      %vm171 = vcmp.ge.s32.totalorder %v28, %v167
      %v172 = vsel %vm168, 1, 0
      %v173 = vsel %vm169, 1, 0
      %v174 = vsel %vm170, 1, 0
      %v175 = vsel %vm171, 1, 0
      %v176 = vsel %vm49, %v172, 0
      %v177 = vsel %vm49, %v173, 0
      %v178 = vsel %vm49, %v174, 0
      %v179 = vsel %vm49, %v175, 0
      %v180 = vadd.s32 %v176, %v177
      %v181 = vadd.s32 %v178, %v179
      %v182 = vadd.s32 %v180, %v181
      %v183 = vand.u32 %v182, 65535
      %v184 = vshrl.u32 %v182, 16
      %v185 = vcvt.s32.f32 %v183
      %v186 = vcvt.s32.f32 %v184
      %187 = vadd.xlane.f32.xlu0 %v185
      %v188 = vpop.xlane.xlu0 %187
      %189 = vadd.xlane.f32.xlu0 %v186
      %v190 = vpop.xlane.xlu0 %189
      %v191 = vcvt.f32.s32 %v188
      %v192 = vcvt.f32.s32 %v190
      %v193 = vshll.u32 %v192, 16
      %v194 = vadd.s32 %v193, %v191
      %v195 = vrot.slane %v194, 4
      %v196 = vadd.s32 %v194, %v195
      %v197 = vrot.slane %v196, 2
      %v198 = vadd.s32 %v196, %v197
      %v199 = vrot.slane %v198, 1
      %v200 = vadd.s32 %v198, %v199
      %s201 = vtos %v200
      %p202 = scmp.ge.s32.totalorder %s201, 512
      %p203 = scmp.ge.s32.totalorder %s166, 0
      %p204 = pnand %p202, %p203
      %p205 = pneg %p204
      %s206 = scalar_select %p205, %s166, %s164
      %s207 = sshll.u32 4, %s37
      %s208 = sadd.s32 %s35, %s207
      %v209 = vstv %s208
      %vm210 = vcmp.ge.s32.totalorder %v23, %v209
      %vm211 = vcmp.ge.s32.totalorder %v27, %v209
      %vm212 = vcmp.ge.s32.totalorder %v24, %v209
      %vm213 = vcmp.ge.s32.totalorder %v28, %v209
      %v214 = vsel %vm210, 1, 0
      %v215 = vsel %vm211, 1, 0
      %v216 = vsel %vm212, 1, 0
      %v217 = vsel %vm213, 1, 0
      %v218 = vsel %vm49, %v214, 0
      %v219 = vsel %vm49, %v215, 0
      %v220 = vsel %vm49, %v216, 0
      %v221 = vsel %vm49, %v217, 0
      %v222 = vadd.s32 %v218, %v219
      %v223 = vadd.s32 %v220, %v221
      %v224 = vadd.s32 %v222, %v223
      %v225 = vand.u32 %v224, 65535
      %v226 = vshrl.u32 %v224, 16
      %v227 = vcvt.s32.f32 %v225
      %v228 = vcvt.s32.f32 %v226
      %229 = vadd.xlane.f32.xlu0 %v227
      %v230 = vpop.xlane.xlu0 %229
      %231 = vadd.xlane.f32.xlu0 %v228
      %v232 = vpop.xlane.xlu0 %231
      %v233 = vcvt.f32.s32 %v230
      %v234 = vcvt.f32.s32 %v232
      %v235 = vshll.u32 %v234, 16
      %v236 = vadd.s32 %v235, %v233
      %v237 = vrot.slane %v236, 4
      %v238 = vadd.s32 %v236, %v237
      %v239 = vrot.slane %v238, 2
      %v240 = vadd.s32 %v238, %v239
      %v241 = vrot.slane %v240, 1
      %v242 = vadd.s32 %v240, %v241
      %s243 = vtos %v242
      %p244 = scmp.ge.s32.totalorder %s243, 512
      %p245 = scmp.ge.s32.totalorder %s208, 0
      %p246 = pnand %p244, %p245
      %p247 = pneg %p246
      %s248 = scalar_select %p247, %s208, %s206
      %s249 = sshll.u32 5, %s37
      %s250 = sadd.s32 %s35, %s249
      %v251 = vstv %s250
      %vm252 = vcmp.ge.s32.totalorder %v23, %v251
      %vm253 = vcmp.ge.s32.totalorder %v27, %v251
      %vm254 = vcmp.ge.s32.totalorder %v24, %v251
      %vm255 = vcmp.ge.s32.totalorder %v28, %v251
      %v256 = vsel %vm252, 1, 0
      %v257 = vsel %vm253, 1, 0
      %v258 = vsel %vm254, 1, 0
      %v259 = vsel %vm255, 1, 0
      %v260 = vsel %vm49, %v256, 0
      %v261 = vsel %vm49, %v257, 0
      %v262 = vsel %vm49, %v258, 0
      %v263 = vsel %vm49, %v259, 0
      %v264 = vadd.s32 %v260, %v261
      %v265 = vadd.s32 %v262, %v263
      %v266 = vadd.s32 %v264, %v265
      %v267 = vand.u32 %v266, 65535
      %v268 = vshrl.u32 %v266, 16
      %v269 = vcvt.s32.f32 %v267
      %v270 = vcvt.s32.f32 %v268
      %271 = vadd.xlane.f32.xlu0 %v269
      %v272 = vpop.xlane.xlu0 %271
      %273 = vadd.xlane.f32.xlu0 %v270
      %v274 = vpop.xlane.xlu0 %273
      %v275 = vcvt.f32.s32 %v272
      %v276 = vcvt.f32.s32 %v274
      %v277 = vshll.u32 %v276, 16
      %v278 = vadd.s32 %v277, %v275
      %v279 = vrot.slane %v278, 4
      %v280 = vadd.s32 %v278, %v279
      %v281 = vrot.slane %v280, 2
      %v282 = vadd.s32 %v280, %v281
      %v283 = vrot.slane %v282, 1
      %v284 = vadd.s32 %v282, %v283
      %s285 = vtos %v284
      %p286 = scmp.ge.s32.totalorder %s285, 512
      %p287 = scmp.ge.s32.totalorder %s250, 0
      %p288 = pnand %p286, %p287
      %p289 = pneg %p288
      %s290 = scalar_select %p289, %s250, %s248
      %s291 = sshll.u32 6, %s37
      %s292 = sadd.s32 %s35, %s291
      %v293 = vstv %s292
      %vm294 = vcmp.ge.s32.totalorder %v23, %v293
      %vm295 = vcmp.ge.s32.totalorder %v27, %v293
      %vm296 = vcmp.ge.s32.totalorder %v24, %v293
      %vm297 = vcmp.ge.s32.totalorder %v28, %v293
      %v298 = vsel %vm294, 1, 0
      %v299 = vsel %vm295, 1, 0
      %v300 = vsel %vm296, 1, 0
      %v301 = vsel %vm297, 1, 0
      %v302 = vsel %vm49, %v298, 0
      %v303 = vsel %vm49, %v299, 0
      %v304 = vsel %vm49, %v300, 0
      %v305 = vsel %vm49, %v301, 0
      %v306 = vadd.s32 %v302, %v303
      %v307 = vadd.s32 %v304, %v305
      %v308 = vadd.s32 %v306, %v307
      %v309 = vand.u32 %v308, 65535
      %v310 = vshrl.u32 %v308, 16
      %v311 = vcvt.s32.f32 %v309
      %v312 = vcvt.s32.f32 %v310
      %313 = vadd.xlane.f32.xlu0 %v311
      %v314 = vpop.xlane.xlu0 %313
      %315 = vadd.xlane.f32.xlu0 %v312
      %v316 = vpop.xlane.xlu0 %315
      %v317 = vcvt.f32.s32 %v314
      %v318 = vcvt.f32.s32 %v316
      %v319 = vshll.u32 %v318, 16
      %v320 = vadd.s32 %v319, %v317
      %v321 = vrot.slane %v320, 4
      %v322 = vadd.s32 %v320, %v321
      %v323 = vrot.slane %v322, 2
      %v324 = vadd.s32 %v322, %v323
      %v325 = vrot.slane %v324, 1
      %v326 = vadd.s32 %v324, %v325
      %s327 = vtos %v326
      %p328 = scmp.ge.s32.totalorder %s327, 512
      %p329 = scmp.ge.s32.totalorder %s292, 0
      %p330 = pnand %p328, %p329
      %p331 = pneg %p330
      %s332 = scalar_select %p331, %s292, %s290
      %s333 = sshll.u32 7, %s37
      %s334 = sadd.s32 %s35, %s333
      %v335 = vstv %s334
      %vm336 = vcmp.ge.s32.totalorder %v23, %v335
      %vm337 = vcmp.ge.s32.totalorder %v27, %v335
      %vm338 = vcmp.ge.s32.totalorder %v24, %v335
      %vm339 = vcmp.ge.s32.totalorder %v28, %v335
      %v340 = vsel %vm336, 1, 0
      %v341 = vsel %vm337, 1, 0
      %v342 = vsel %vm338, 1, 0
      %v343 = vsel %vm339, 1, 0
      %v344 = vsel %vm49, %v340, 0
      %v345 = vsel %vm49, %v341, 0
      %v346 = vsel %vm49, %v342, 0
      %v347 = vsel %vm49, %v343, 0
      %v348 = vadd.s32 %v344, %v345
      %v349 = vadd.s32 %v346, %v347
      %v350 = vadd.s32 %v348, %v349
      %v351 = vand.u32 %v350, 65535
      %v352 = vshrl.u32 %v350, 16
      %v353 = vcvt.s32.f32 %v351
      %v354 = vcvt.s32.f32 %v352
      %355 = vadd.xlane.f32.xlu0 %v353
      %v356 = vpop.xlane.xlu0 %355
      %357 = vadd.xlane.f32.xlu0 %v354
      %v358 = vpop.xlane.xlu0 %357
      %v359 = vcvt.f32.s32 %v356
      %v360 = vcvt.f32.s32 %v358
      %v361 = vshll.u32 %v360, 16
      %v362 = vadd.s32 %v361, %v359
      %v363 = vrot.slane %v362, 4
      %v364 = vadd.s32 %v362, %v363
      %v365 = vrot.slane %v364, 2
      %v366 = vadd.s32 %v364, %v365
      %v367 = vrot.slane %v366, 1
      %v368 = vadd.s32 %v366, %v367
      %s369 = vtos %v368
      %p370 = scmp.ge.s32.totalorder %s369, 512
      %p371 = scmp.ge.s32.totalorder %s334, 0
      %p372 = pnand %p370, %p371
      %p373 = pneg %p372
      %s374 = scalar_select %p373, %s334, %s332
    $region14: #{tpu_custom_call.1} parent=1 // loop_footer
      %s34 = sadd.s32 1, %s30
    $region15: #{tpu_custom_call.1} parent=1 // loop_footer_branch
      %29 = sbr.rel target = $region11
    $region16: #{tpu_custom_call.1} parent=1 // loop_exit
      _
    %v375 = vstv %s35
    %vm376 = vcmp.ge.s32.totalorder %v23, %v375
    %vm377 = vcmp.ge.s32.totalorder %v27, %v375
    %vm378 = vcmp.ge.s32.totalorder %v24, %v375
    %vm379 = vcmp.ge.s32.totalorder %v28, %v375
    %v382 = vcombine.high %v21, %v21
    %v383 = vcombine.high %v22, %v22
    %v386 = vsel %vm376, %v21, 0.0
    %v387 = vsel %vm377, %v382, 0.0
    %v388 = vsel %vm378, %v22, 0.0
    %v389 = vsel %vm379, %v383, 0.0
    %v394 = vcombine.low %v386, %v387
    %v395 = vcombine.low %v388, %v389
    %398 = vst [vmem:[#allocation5] sm:$0xff] %v394
    %399 = vst [vmem:[#allocation5 + $0x8] sm:$0xff] %v395
    // Predicated region
    $region17: #{tpu_custom_call.1} parent=1 // pred_check
      _
    $region18: #{tpu_custom_call.1} parent=1 // pred_check_branch
      %401 = sbr.rel (0) target = $region20
    $region19: #{tpu_custom_call.1} parent=1 // pred_region
      %s403 = ssub.s32 256, 256
      %404 = vsyncadd [#allocation4], %s403
      %s406 = sshll.u32 [#allocation5], 4
      %s407 = int_to_ptr.vmem [resolvable:$true] %s406
      %409 = dma.vmem_to_hbm [thread:$0]  %s407, 256, %s1, [#allocation4]
    $region20: #{tpu_custom_call.1} parent=1 // pred_fallthru
      _
    // Predicated region
    $region21: #{tpu_custom_call.1} parent=1 // pred_check
      _
    $region22: #{tpu_custom_call.1} parent=1 // pred_check_branch
      %411 = sbr.rel (0) target = $region24
    $region23: #{tpu_custom_call.1} parent=1 // pred_region
      %412 = dma.done [#allocation4], 256
    $region24: #{tpu_custom_call.1} parent=1 // pred_fallthru
      _
    %413 = vsyncpa [#allocation3], 1
    %414 = vsyncpa [#allocation4], 1

</llo_original>
